<compile_context>
chip_gen: v5e
topology: v5e:2x2
jax: 0.10.0
libtpu: 0.0.40
codegen_flags: <defaults>
</compile_context>

<pallas_src>
import functools

import jax
import jax.numpy as jnp
from jax import lax
from jax.experimental import pallas as pl
from jax.experimental.pallas import tpu as pltpu

_LANES = 128


def _round_up(x, m):
    return (x + m - 1) // m * m


def _sublane_multiple(dtype):
    # packed sublane tile: 8 rows for 4-byte, 16 for 2-byte, 32 for 1-byte
    its = jnp.dtype(dtype).itemsize
    return 8 * max(1, 4 // its)


def _num_tensorcores():
    """2 on v7x (2 TensorCores/chip), else 1.  Conservative fallback: 1."""
    try:
        kind = jax.devices()[0].device_kind.lower()
    except Exception:
        return 1
    return 2 if ("v7" in kind or "7x" in kind) else 1


def _sse_kernel_rows(x_ref, y_ref, o_ref, *, rows_valid, tr, n_inner,
                     n_full_blocks, need_mask):
    """(B, tr, 128) tile -> accumulate per-sample partial SSE into (B, 128).

    Grid: (n_outer 'parallel', n_inner 'arbitrary').  Only boundary / clamped
    blocks take the masked path; interior blocks are a plain accumulate.
    """
    i = pl.program_id(1)

    @pl.when(i == 0)
    def _():
        o_ref[...] = jnp.zeros_like(o_ref)

    d = x_ref[...].astype(jnp.float32) - y_ref[...].astype(jnp.float32)
    sq = d * d                                            # (B, tr, 128) f32

    if not need_mask:                                     # static (trace-time)
        o_ref[...] += jnp.sum(sq, axis=1)
    else:
        blk = pl.program_id(0) * n_inner + i

        @pl.when(blk < n_full_blocks)                     # interior block
        def _():
            o_ref[...] += jnp.sum(sq, axis=1)

        @pl.when(blk >= n_full_blocks)                    # boundary / OOB
        def _():
            rows = blk * tr + lax.broadcasted_iota(jnp.int32, (1, tr, 1), 1)
            o_ref[...] += jnp.sum(jnp.where(rows < rows_valid, sq, 0.0),
                                  axis=1)


def _sse_kernel_cols(x_ref, y_ref, o_ref, *, cols_valid, tc, n_full_blocks,
                     need_mask):
    """(B, tc) tile -> accumulate per-sample partial SSE into (B, 1).

    Ragged-N path: the last block's lanes beyond cols_valid are undefined
    (partial boundary block) and are masked out.
    """
    j = pl.program_id(0)

    @pl.when(j == 0)
    def _():
        o_ref[...] = jnp.zeros_like(o_ref)

    d = x_ref[...].astype(jnp.float32) - y_ref[...].astype(jnp.float32)
    sq = d * d                                            # (B, tc) f32

    if not need_mask:
        o_ref[...] += jnp.sum(sq, axis=1, keepdims=True)
    else:
        @pl.when(j < n_full_blocks)                       # interior block
        def _():
            o_ref[...] += jnp.sum(sq, axis=1, keepdims=True)

        @pl.when(j >= n_full_blocks)                      # boundary block
        def _():
            cols = j * tc + lax.broadcasted_iota(jnp.int32, (1, tc), 1)
            o_ref[...] += jnp.sum(jnp.where(cols < cols_valid, sq, 0.0),
                                  axis=1, keepdims=True)


def psnr_pallas(x, y, *, data_range=1.0, reduction='none',
                target_block_bytes=None):
    """PSNR between x and y (same shape, batch-first). Hot path runs in Pallas."""
    assert x.shape == y.shape, "input/target shape mismatch"
    B = x.shape[0]
    dr2 = float(data_range) ** 2

    def _reduce(ret):
        if reduction == 'mean':
            return ret.mean()
        if reduction == 'sum':
            return ret.sum()
        return ret

    xf = x.reshape(B, -1)            # contiguous reshape: free (bitcast)
    yf = y.reshape(B, -1)
    n_elems = xf.shape[1]
    if n_elems == 0:
        # mean over an empty axis is NaN in the reference module
        return _reduce(jnp.full((B,), jnp.nan, jnp.float32))

    n_tc = _num_tensorcores()
    is_v7 = n_tc == 2
    if target_block_bytes is None:
        # per-input block target: smaller on v7x (64 MiB VMEM/TC), bigger on
        # v5e/v6e (128 MiB VMEM) to amortize the ~0.35us/grid-step overhead
        target_block_bytes = (3 if is_v7 else 6) * 1024 * 1024
    vmem_cap = (48 if is_v7 else 64) * 1024 * 1024
    # cap per-input block so 2 inputs x 2 buffers + slack fits under the cap
    target_block_bytes = min(target_block_bytes,
                             (vmem_cap - 4 * 1024 * 1024) // 4)

    its_x = jnp.dtype(x.dtype).itemsize
    its_y = jnp.dtype(y.dtype).itemsize
    max_its = max(its_x, its_y)
    sub_mult = max(_sublane_multiple(x.dtype), _sublane_multiple(y.dtype))
    slack = 4 * 1024 * 1024

    if n_elems % _LANES == 0:
        # ---------- aligned path: (B, R, 128), row-blocked reduction ----------
        R = n_elems // _LANES
        x3 = xf.reshape(B, R, _LANES)     # contiguous reshape: free
        y3 = yf.reshape(B, R, _LANES)

        # NOTE: very large B would additionally want B-blocking (extra
        # parallel grid axis); unnecessary at typical image-batch sizes.
        tr = target_block_bytes // (B * _LANES * max_its)
        tr = max(sub_mult, tr // sub_mult * sub_mult)
        if tr >= R:
            tr = R                        # single full-extent row block
        nb = pl.cdiv(R, tr)               # row blocks along the reduction
        n_outer = n_tc if nb >= n_tc else 1   # 2-way split on v7x only
        n_inner = pl.cdiv(nb, n_outer)
        need_mask = (n_outer * n_inner * tr != R)
        n_full = R // tr                  # blocks with no invalid rows

        def in_index_map(o, i):
            blk = o * n_inner + i
            # fully out-of-range blocks (grid padding on v7x) re-read the last
            # valid block; their rows are masked to zero in the kernel
            return (0, jnp.minimum(blk, nb - 1), 0)

        kernel = functools.partial(
            _sse_kernel_rows, rows_valid=R, tr=tr, n_inner=n_inner,
            n_full_blocks=n_full, need_mask=need_mask)

        blk_bytes = sum(B * _round_up(tr, _sublane_multiple(d)) * _LANES
                        * jnp.dtype(d).itemsize for d in (x.dtype, y.dtype))
        vmem_limit = int(min(vmem_cap,
                             max(16 * 1024 * 1024, 2 * blk_bytes + slack)))

        partial = pl.pallas_call(
            kernel,
            out_shape=jax.ShapeDtypeStruct((n_outer, B, _LANES), jnp.float32),
            grid_spec=pltpu.PrefetchScalarGridSpec(
                num_scalar_prefetch=0,
                grid=(n_outer, n_inner),
                in_specs=[
                    pl.BlockSpec((B, tr, _LANES), in_index_map),
                    pl.BlockSpec((B, tr, _LANES), in_index_map),
                ],
                out_specs=pl.BlockSpec((None, B, _LANES),
                                       lambda o, i: (o, 0, 0)),
            ),
            compiler_params=pltpu.CompilerParams(
                dimension_semantics=("parallel", "arbitrary"),
                vmem_limit_bytes=vmem_limit),
        )(x3, y3)
        sse = jnp.sum(partial, axis=(0, 2))               # (B,)
    else:
        # ---------- ragged path: 2D (B, N), lane-tail masked in-kernel --------
        # (no jnp.pad / slice copy; exactly one HBM read of each input)
        tc = target_block_bytes // (B * max_its)
        tc = max(_LANES, tc // _LANES * _LANES)
        if tc >= n_elems:
            tc = n_elems                  # single full-extent block
            nb = 1
            need_mask = False
        else:
            nb = pl.cdiv(n_elems, tc)
            need_mask = (nb * tc != n_elems)
        n_full = n_elems // tc

        kernel = functools.partial(
            _sse_kernel_cols, cols_valid=n_elems, tc=tc,
            n_full_blocks=n_full, need_mask=need_mask)

        blk_bytes = sum(
            _round_up(B, _sublane_multiple(d)) * _round_up(tc, _LANES)
            * jnp.dtype(d).itemsize for d in (x.dtype, y.dtype))
        vmem_limit = int(min(vmem_cap,
                             max(16 * 1024 * 1024, 2 * blk_bytes + slack)))

        partial = pl.pallas_call(
            kernel,
            out_shape=jax.ShapeDtypeStruct((B, 1), jnp.float32),
            grid_spec=pltpu.PrefetchScalarGridSpec(
                num_scalar_prefetch=0,
                grid=(nb,),
                in_specs=[
                    pl.BlockSpec((B, tc), lambda j: (0, j)),
                    pl.BlockSpec((B, tc), lambda j: (0, j)),
                ],
                out_specs=pl.BlockSpec((B, 1), lambda j: (0, 0)),
            ),
            compiler_params=pltpu.CompilerParams(
                dimension_semantics=("arbitrary",),
                vmem_limit_bytes=vmem_limit),
        )(xf, yf)
        sse = partial[:, 0]                               # (B,)

    mse = sse / jnp.float32(n_elems)
    ret = 10.0 * jnp.log10(dr2 / (mse + 1e-12))
    return _reduce(ret)


def _psnr_ref(x, y, data_range=1.0, reduction='none'):
    B = x.shape[0]
    xf = x.reshape(B, -1).astype(jnp.float32)
    yf = y.reshape(B, -1).astype(jnp.float32)
    mse = jnp.mean((xf - yf) ** 2, axis=-1)
    ret = 10.0 * jnp.log10(data_range ** 2 / (mse + 1e-12))
    if reduction == 'mean':
        ret = ret.mean()
    elif reduction == 'sum':
        ret = ret.sum()
    return ret


if __name__ == "__main__":
    key = jax.random.PRNGKey(0)
    k1, k2, k3, k4, k5, k6 = jax.random.split(key, 6)

    # 1) primary case: small NCHW f32, lane-aligned feature size (N = 1024)
    x = jax.random.uniform(k1, (2, 4, 16, 16), dtype=jnp.float32)
    noise = 0.05 * jax.random.normal(k2, (2, 4, 16, 16), dtype=jnp.float32)
    y = jnp.clip(x + noise, 0.0, 1.0)
    out = jax.block_until_ready(psnr_pallas(x, y, data_range=1.0,
                                            reduction='none'))
    ref = _psnr_ref(x, y, 1.0, 'none')
    assert out.shape == (2,)
    assert jnp.allclose(out, ref, rtol=1e-4, atol=1e-4), (out, ref)

    # 2) aligned N with a row count not divisible by the block (N = 2304,
    #    R = 18, tiny block target): exercises multi-block reduction, edge-only
    #    row masking and (on v7x) the clamped outer-split blocks.
    x2 = jax.random.uniform(k3, (2, 4, 24, 24), dtype=jnp.float32)
    y2 = x2 + 0.02 * jax.random.normal(k4, (2, 4, 24, 24), dtype=jnp.float32)
    out2 = jax.block_until_ready(
        psnr_pallas(x2, y2, data_range=1.0, reduction='sum',
                    target_block_bytes=8 * 1024))
    ref2 = _psnr_ref(x2, y2, 1.0, 'sum')
    assert jnp.allclose(out2, ref2, rtol=1e-4, atol=1e-4), (out2, ref2)

    # 3) ragged feature size (N = 3219, not a multiple of 128): 2D path with
    #    in-kernel lane-tail masking and NO padding copy, reduction='mean'.
    x3 = jax.random.uniform(k5, (2, 3, 37, 29), dtype=jnp.float32)
    y3 = x3 + 0.02 * jax.random.normal(k6, (2, 3, 37, 29), dtype=jnp.float32)
    out3 = jax.block_until_ready(
        psnr_pallas(x3, y3, data_range=1.0, reduction='mean',
                    target_block_bytes=8 * 1024))
    ref3 = _psnr_ref(x3, y3, 1.0, 'mean')
    assert jnp.allclose(out3, ref3, rtol=1e-4, atol=1e-4), (out3, ref3)

    print("KERNEL_OK")
</pallas_src>

<mosaic_0001>
module attributes {stable_mosaic.version = 11 : i64} {
  func.func @_sse_kernel_rows(%arg0: i32, %arg1: i32, %arg2: memref<2x8x128xf32, #tpu.memory_space<vmem>>, %arg3: memref<2x8x128xf32, #tpu.memory_space<vmem>>, %arg4: memref<1x2x128xf32, #tpu.memory_space<vmem>>) attributes {dimension_semantics = [#tpu.dimension_semantics<parallel>, #tpu.dimension_semantics<arbitrary>], iteration_bounds = array<i64: 1, 1>, scalar_prefetch = 0 : i64, scratch_operands = 0 : i64, tpu.core_type = #tpu.core_type<tc>, window_params = [{transform_indices = @transform_0, window_bounds = array<i64: 2, 8, 128>}, {transform_indices = @transform_1, window_bounds = array<i64: 2, 8, 128>}, {transform_indices = @transform_2, window_bounds = array<i64: 1, 2, 128>}]} {
    %c0_i32 = arith.constant 0 : i32
    %0 = arith.cmpi eq, %arg1, %c0_i32 : i32
    %1 = arith.extui %0 : i1 to i32
    %c0_i32_0 = arith.constant 0 : i32
    %2 = arith.cmpi ne, %1, %c0_i32_0 : i32
    scf.if %2 {
      %cst_12 = arith.constant 0.000000e+00 : f32
      %14 = vector.broadcast %cst_12 : f32 to vector<2x128xf32>
      %c0_13 = arith.constant 0 : index
      %c0_14 = arith.constant 0 : index
      %c0_15 = arith.constant 0 : index
      %15 = vector.load %arg4[%c0_13, %c0_14, %c0_15] : memref<1x2x128xf32, #tpu.memory_space<vmem>>, vector<1x2x128xf32>
      %16 = vector.shape_cast %15 : vector<1x2x128xf32> to vector<2x128xf32>
      %17 = vector.shape_cast %14 : vector<2x128xf32> to vector<1x2x128xf32>
      tpu.vector_store %arg4[%c0_13, %c0_14, %c0_15], %17 {strides = array<i32>} : memref<1x2x128xf32, #tpu.memory_space<vmem>>, vector<1x2x128xf32>,
    } else {
    }
    %c0 = arith.constant 0 : index
    %c0_1 = arith.constant 0 : index
    %c0_2 = arith.constant 0 : index
    %3 = vector.load %arg2[%c0, %c0_1, %c0_2] : memref<2x8x128xf32, #tpu.memory_space<vmem>>, vector<2x8x128xf32>
    %c0_3 = arith.constant 0 : index
    %c0_4 = arith.constant 0 : index
    %c0_5 = arith.constant 0 : index
    %4 = vector.load %arg3[%c0_3, %c0_4, %c0_5] : memref<2x8x128xf32, #tpu.memory_space<vmem>>, vector<2x8x128xf32>
    %5 = arith.subf %3, %4 : vector<2x8x128xf32>
    %6 = arith.mulf %5, %5 : vector<2x8x128xf32>
    %c0_6 = arith.constant 0 : index
    %c0_7 = arith.constant 0 : index
    %c0_8 = arith.constant 0 : index
    %7 = vector.load %arg4[%c0_6, %c0_7, %c0_8] : memref<1x2x128xf32, #tpu.memory_space<vmem>>, vector<1x2x128xf32>
    %8 = vector.shape_cast %7 : vector<1x2x128xf32> to vector<2x128xf32>
    %cst = arith.constant dense<0.000000e+00> : vector<2x128xf32>
    %9 = vector.multi_reduction <add>, %6, %cst [1] : vector<2x8x128xf32> to vector<2x128xf32>
    %10 = arith.addf %8, %9 : vector<2x128xf32>
    %c0_9 = arith.constant 0 : index
    %c0_10 = arith.constant 0 : index
    %c0_11 = arith.constant 0 : index
    %11 = vector.load %arg4[%c0_9, %c0_10, %c0_11] : memref<1x2x128xf32, #tpu.memory_space<vmem>>, vector<1x2x128xf32>
    %12 = vector.shape_cast %11 : vector<1x2x128xf32> to vector<2x128xf32>
    %13 = vector.shape_cast %10 : vector<2x128xf32> to vector<1x2x128xf32>
    tpu.vector_store %arg4[%c0_9, %c0_10, %c0_11], %13 {strides = array<i32>} : memref<1x2x128xf32, #tpu.memory_space<vmem>>, vector<1x2x128xf32>,
    return
  }
  func.func @transform_0(%arg0: i32, %arg1: i32) -> (i32, i32, i32) {
    %c1_i32 = arith.constant 1 : i32
    %0 = arith.muli %arg0, %c1_i32 : i32
    %1 = arith.addi %0, %arg1 : i32
    %c0_i32 = arith.constant 0 : i32
    %2 = arith.minsi %1, %c0_i32 : i32
    %c0_i32_0 = arith.constant 0 : i32
    %c0_i32_1 = arith.constant 0 : i32
    %c0_i32_2 = arith.constant 0 : i32
    return %c0_i32_0, %2, %c0_i32_1 : i32, i32, i32
  }
  func.func @transform_1(%arg0: i32, %arg1: i32) -> (i32, i32, i32) {
    %c1_i32 = arith.constant 1 : i32
    %0 = arith.muli %arg0, %c1_i32 : i32
    %1 = arith.addi %0, %arg1 : i32
    %c0_i32 = arith.constant 0 : i32
    %2 = arith.minsi %1, %c0_i32 : i32
    %c0_i32_0 = arith.constant 0 : i32
    %c0_i32_1 = arith.constant 0 : i32
    %c0_i32_2 = arith.constant 0 : i32
    return %c0_i32_0, %2, %c0_i32_1 : i32, i32, i32
  }
  func.func @transform_2(%arg0: i32, %arg1: i32) -> (i32, i32, i32) {
    %c0_i32 = arith.constant 0 : i32
    %c0_i32_0 = arith.constant 0 : i32
    %c0_i32_1 = arith.constant 0 : i32
    return %arg0, %c0_i32, %c0_i32_0 : i32, i32, i32
  }
}

</mosaic_0001>

<llo_original>
// kernel: tpu_custom_call.1
$region0: #{tpu_custom_call.1}
  #allocation0 [shape = 'u32[]', space=smem, size = 0x4, offset = 0x4, fixed_abs, tag = 'smem constant byte address 0x4 - core index']
  #allocation1 [shape = 'u32[72,128]{1,0:T(1,128)}', space=vmem, size = 0x9000, scoped, tag = 'internal scratch']
  %s0 = inlined_call_operand.hbm [shape: f32[2,8,128], index: 0, kind: input, shape index: {}]
  %s1 = inlined_call_operand.hbm [shape: f32[2,8,128], index: 1, kind: input, shape index: {}]
  %s2 = inlined_call_operand.hbm [shape: f32[1,2,128], index: 2, kind: output, shape index: {}]
  %s3 = sld [smem:[#allocation0]]
  $region30: #{tpu_custom_call.1} parent=0
    _
  %s5 = ssub.s32 1, %s3
  %s6 = scalar_select 0, %s5, %s3
  $region1: #{tpu_custom_call.1} parent=0
    #allocation2 [shape = 'u8[8192]{0}', space=vmem, size = 0x2000, scoped, tag = 'input window, operand 0, single buffered']
    #allocation3 [shape = 's32[1]{0}', space=sflag, size = 0x4, scoped, tag = 'scoped memory for tpu_custom_call.1']
    #allocation4 [shape = 's32[1]{0}', space=sflag, size = 0x4, scoped, tag = 'scoped memory for tpu_custom_call.1']
    #allocation5 [shape = 'u8[8192]{0}', space=vmem, size = 0x2000, scoped, tag = 'input window, operand 1, single buffered']
    #allocation6 [shape = 's32[1]{0}', space=sflag, size = 0x4, scoped, tag = 'scoped memory for tpu_custom_call.1']
    #allocation7 [shape = 'u8[1024]{0}', space=vmem, size = 0x400, scoped, tag = 'output window, operand 0, single buffered']
    %7 = vsyncpa [#allocation3], 0
    %8 = vsyncpa [#allocation6], 0
    %9 = vsyncpa [#allocation4], 0
    // Predicated region
    $region2: #{tpu_custom_call.1} parent=1 // pred_check
      _
    $region3: #{tpu_custom_call.1} parent=1 // pred_check_branch
      %11 = sbr.rel (0) target = $region5
    $region4: #{tpu_custom_call.1} parent=1 // pred_region
      %s12 = sadd.s32 0, 0
      %p13 = scmp.lt.s32.totalorder %s12, 0
      %s14 = scalar_select %p13, %s12, 0
      %16 = vsyncadd [#allocation3], 0
      %s17 = smul.addr %s14, 8
      %s18 = scalar_lea.hbm %s0, %s17
      %s19 = sshll.u32 %s18, 4
      %s20 = int_to_ptr.hbm [resolvable:$true] %s19
      %s21 = sshll.u32 [#allocation2], 4
      %s22 = int_to_ptr.vmem [resolvable:$true] %s21
      %27 = dma.hbm_to_vmem [thread:$0]  %s20, 256, %s22, [#allocation3], 128, 128, 8
    $region5: #{tpu_custom_call.1} parent=1 // pred_fallthru
      _
    // Predicated region
    $region6: #{tpu_custom_call.1} parent=1 // pred_check
      _
    $region7: #{tpu_custom_call.1} parent=1 // pred_check_branch
      %29 = sbr.rel (0) target = $region9
    $region8: #{tpu_custom_call.1} parent=1 // pred_region
      %s30 = sadd.s32 0, 0
      %p31 = scmp.lt.s32.totalorder %s30, 0
      %s32 = scalar_select %p31, %s30, 0
      %34 = vsyncadd [#allocation6], 0
      %s35 = smul.addr %s32, 8
      %s36 = scalar_lea.hbm %s1, %s35
      %s37 = sshll.u32 %s36, 4
      %s38 = int_to_ptr.hbm [resolvable:$true] %s37
      %s39 = sshll.u32 [#allocation5], 4
      %s40 = int_to_ptr.vmem [resolvable:$true] %s39
      %45 = dma.hbm_to_vmem [thread:$0]  %s38, 256, %s40, [#allocation6], 128, 128, 8
    $region9: #{tpu_custom_call.1} parent=1 // pred_fallthru
      _
    // Predicated region
    $region10: #{tpu_custom_call.1} parent=1 // pred_check
      _
    $region11: #{tpu_custom_call.1} parent=1 // pred_check_branch
      %47 = sbr.rel (0) target = $region13
    $region12: #{tpu_custom_call.1} parent=1 // pred_region
      %49 = dma.done [#allocation3], 256
    $region13: #{tpu_custom_call.1} parent=1 // pred_fallthru
      _
    // Predicated region
    $region14: #{tpu_custom_call.1} parent=1 // pred_check
      _
    $region15: #{tpu_custom_call.1} parent=1 // pred_check_branch
      %51 = sbr.rel (0) target = $region17
    $region16: #{tpu_custom_call.1} parent=1 // pred_region
      %53 = dma.done [#allocation6], 256
    $region17: #{tpu_custom_call.1} parent=1 // pred_fallthru
      _
    %s54 = sadd.s32 0, 0
    %p55 = scmp.lt.s32.totalorder %s54, 0
    %s56 = scalar_select %p55, %s54, 0
    %s57 = sadd.s32 0, 0
    %p58 = scmp.lt.s32.totalorder %s57, 0
    %s59 = scalar_select %p58, %s57, 0
    %p60 = scmp.eq.s32.totalorder 0, 0
    // Predicated region
    $region18: #{tpu_custom_call.1} parent=1 // pred_check
      %p61 = pneg %p60
    $region19: #{tpu_custom_call.1} parent=1 // pred_check_branch
      %63 = sbr.rel (%p61) target = $region21
    $region20: #{tpu_custom_call.1} parent=1 // pred_region
      %64 = vst [vmem:[#allocation7] sm:$0x3] 0.0
    $region21: #{tpu_custom_call.1} parent=1 // pred_fallthru
      _
    %v65 = vld [vmem:[#allocation2] sm:$0xff]
    %v66 = vld [vmem:[#allocation2 + $0x8] sm:$0xff]
    %v67 = vld [vmem:[#allocation5] sm:$0xff]
    %v68 = vld [vmem:[#allocation5 + $0x8] sm:$0xff]
    %v69 = vsub.f32 %v65, %v67
    %v70 = vsub.f32 %v66, %v68
    %v71 = vmul.f32 %v69, %v69
    %v72 = vmul.f32 %v70, %v70
    %v73 = vld [vmem:[#allocation7] sm:$0x3]
    %v74 = vrot.slane %v71, 4
    %v75 = vadd.f32 %v71, %v74
    %v76 = vrot.slane %v75, 2
    %v77 = vadd.f32 %v75, %v76
    %v78 = vrot.slane %v77, 1
    %v79 = vadd.f32 %v77, %v78
    %v80 = vrot.slane %v72, 4
    %v81 = vadd.f32 %v72, %v80
    %v82 = vrot.slane %v81, 2
    %v83 = vadd.f32 %v81, %v82
    %v84 = vrot.slane %v83, 1
    %v85 = vadd.f32 %v83, %v84
    %vm88 = vcmask 1041409
    %v89 = vsel %vm88, %v85, %v79
    %v91 = vadd.f32 %v73, %v89
    %92 = vst [vmem:[#allocation7] sm:$0x3] %v91
    // Predicated region
    $region22: #{tpu_custom_call.1} parent=1 // pred_check
      _
    $region23: #{tpu_custom_call.1} parent=1 // pred_check_branch
      %94 = sbr.rel (0) target = $region25
    $region24: #{tpu_custom_call.1} parent=1 // pred_region
      %96 = vsyncadd [#allocation4], 0
      %s98 = sshll.u32 [#allocation7], 4
      %s99 = int_to_ptr.vmem [resolvable:$true] %s98
      %s100 = sshll.u32 %s2, 4
      %s101 = int_to_ptr.hbm [resolvable:$true] %s100
      %103 = dma.vmem_to_hbm [thread:$0]  %s99, 32, %s101, [#allocation4]
    $region25: #{tpu_custom_call.1} parent=1 // pred_fallthru
      _
    // Predicated region
    $region26: #{tpu_custom_call.1} parent=1 // pred_check
      _
    $region27: #{tpu_custom_call.1} parent=1 // pred_check_branch
      %105 = sbr.rel (0) target = $region29
    $region28: #{tpu_custom_call.1} parent=1 // pred_region
      %107 = dma.done [#allocation4], 32
    $region29: #{tpu_custom_call.1} parent=1 // pred_fallthru
      _
    %108 = vsyncpa [#allocation3], 1
    %109 = vsyncpa [#allocation6], 1
    %110 = vsyncpa [#allocation4], 1

</llo_original>
